<compile_context>
chip_gen: v7x
topology: tpu7x:2x2x1
jax: 0.10.0
libtpu: 0.0.40
codegen_flags: <defaults>
</compile_context>

<pallas_src>
import math
import functools

import jax
import jax.numpy as jnp
from jax import lax
from jax.experimental import pallas as pl
from jax.experimental.pallas import tpu as pltpu


# ----------------------------------------------------------------------------
# helpers
# ----------------------------------------------------------------------------
def _pick_tile(dim, preferred, align):
    """Largest tile <= preferred that divides `dim` and is a multiple of
    `align`; falls back to the full dim (always a legal block shape)."""
    t = preferred
    while t >= align:
        if dim % t == 0:
            return t
        t //= 2
    return dim


# ----------------------------------------------------------------------------
# Tiled linear kernel: y = x @ w.T with w in PyTorch (out_features, in) layout.
# ----------------------------------------------------------------------------
def _linear_kernel(x_ref, w_ref, o_ref, acc_ref):
    @pl.when(pl.program_id(2) == 0)
    def _init():
        acc_ref[...] = jnp.zeros(acc_ref.shape, jnp.float32)

    # contract on the weight's second axis (native layout, no transpose)
    acc_ref[...] += lax.dot_general(
        x_ref[...], w_ref[...],
        dimension_numbers=(((1,), (1,)), ((), ())),
        preferred_element_type=jnp.float32)

    @pl.when(pl.program_id(2) == pl.num_programs(2) - 1)
    def _store():
        o_ref[...] = acc_ref[...].astype(o_ref.dtype)


def pallas_linear(x, w, *, tm=256, tn=256, tk=512):
    M, K = x.shape
    N, K2 = w.shape
    assert K == K2
    tm = _pick_tile(M, tm, 8)      # sublane dim of x / out
    tn = _pick_tile(N, tn, 128)    # lane dim of out (keep stores lane-dense)
    tk = _pick_tile(K, tk, 128)    # lane dim of x and w
    grid = (M // tm, N // tn, K // tk)
    return pl.pallas_call(
        _linear_kernel,
        out_shape=jax.ShapeDtypeStruct((M, N), jnp.float32),
        grid=grid,
        in_specs=[pl.BlockSpec((tm, tk), lambda i, j, k: (i, k)),
                  pl.BlockSpec((tn, tk), lambda i, j, k: (j, k))],
        out_specs=pl.BlockSpec((tm, tn), lambda i, j, k: (i, j)),
        scratch_shapes=[pltpu.VMEM((tm, tn), jnp.float32)],
        compiler_params=pltpu.CompilerParams(
            dimension_semantics=("parallel", "parallel", "arbitrary")),
    )(x, w)


# ----------------------------------------------------------------------------
# Flash-style RoPE attention kernel. One (batch, head) pair per outer grid
# point, K/V streamed over the innermost (arbitrary) axis with online softmax.
# ----------------------------------------------------------------------------
def _rot_half(x, half):
    # NeoX-style rotate-half: concat(x[half:], x[:half]); the sign lives in the
    # precomputed sin table, so no mask / negate / iota is needed in-kernel.
    return jnp.concatenate([x[:, half:], x[:, :half]], axis=-1)


def _flash_rope_kernel(q_ref, k_ref, v_ref, cos_q_ref, sin_q_ref,
                       cos_k_ref, sin_k_ref, o_ref,
                       qrot_ref, m_ref, l_ref, acc_ref, *, scale, half):
    kv = pl.program_id(2)

    @pl.when(kv == 0)
    def _init():
        q = q_ref[...]
        # RoPE + 1/sqrt(d) scale folded into q once per (batch, head)
        qrot_ref[...] = (q * cos_q_ref[...] +
                         _rot_half(q, half) * sin_q_ref[...]) * scale
        m_ref[...] = jnp.full(m_ref.shape, -jnp.inf, jnp.float32)
        l_ref[...] = jnp.zeros(l_ref.shape, jnp.float32)
        acc_ref[...] = jnp.zeros(acc_ref.shape, jnp.float32)

    # RoPE on this K tile (table tile is DMA'd alongside the K tile)
    k = k_ref[...]
    k_rot = k * cos_k_ref[...] + _rot_half(k, half) * sin_k_ref[...]

    # scores: contract the feature axis of both operands (no k.T relayout)
    s = lax.dot_general(qrot_ref[...], k_rot,
                        dimension_numbers=(((1,), (1,)), ((), ())),
                        preferred_element_type=jnp.float32)        # (T, tkv)

    m_prev = m_ref[...]
    m_new = jnp.maximum(m_prev, jnp.max(s, axis=-1, keepdims=True))
    alpha = jnp.exp(m_prev - m_new)
    p = jnp.exp(s - m_new)
    l_ref[...] = alpha * l_ref[...] + jnp.sum(p, axis=-1, keepdims=True)
    acc_ref[...] = alpha * acc_ref[...] + jnp.dot(
        p, v_ref[...], preferred_element_type=jnp.float32)
    m_ref[...] = m_new

    @pl.when(kv == pl.num_programs(2) - 1)
    def _finalize():
        # divide only the (T,1) row sums, then broadcast-multiply into acc
        inv_l = 1.0 / l_ref[...]
        o_ref[...] = (acc_ref[...] * inv_l).astype(o_ref.dtype)


def rope_flash_attention(q, k, v, cos_cat, sin_signed, *, kv_tile=512):
    B, H, T, D = q.shape
    scale = 1.0 / math.sqrt(D)
    tkv = _pick_tile(T, kv_tile, 8)
    num_kv = T // tkv
    kern = functools.partial(_flash_rope_kernel, scale=scale, half=D // 2)

    q_spec = pl.BlockSpec((None, None, T, D), lambda b, h, kv: (b, h, 0, 0))
    kv_spec = pl.BlockSpec((None, None, tkv, D), lambda b, h, kv: (b, h, kv, 0))
    tbl_q_spec = pl.BlockSpec((T, D), lambda b, h, kv: (0, 0))
    tbl_k_spec = pl.BlockSpec((tkv, D), lambda b, h, kv: (kv, 0))

    return pl.pallas_call(
        kern,
        out_shape=jax.ShapeDtypeStruct((B, H, T, D), jnp.float32),
        grid=(B, H, num_kv),
        in_specs=[q_spec, kv_spec, kv_spec,
                  tbl_q_spec, tbl_q_spec, tbl_k_spec, tbl_k_spec],
        out_specs=q_spec,
        scratch_shapes=[pltpu.VMEM((T, D), jnp.float32),   # rotated, scaled q
                        pltpu.VMEM((T, 1), jnp.float32),   # running max m
                        pltpu.VMEM((T, 1), jnp.float32),   # running sum l
                        pltpu.VMEM((T, D), jnp.float32)],  # output accumulator
        compiler_params=pltpu.CompilerParams(
            dimension_semantics=("parallel", "parallel", "arbitrary")),
    )(q, k, v, cos_cat, sin_signed, cos_cat, sin_signed)


# ----------------------------------------------------------------------------
# RoPE tables and one-time weight prep
# ----------------------------------------------------------------------------
def rope_tables(seq_len, head_dim, base_theta=10000.0):
    freqs = jnp.arange(0, head_dim, 2, dtype=jnp.float32)
    inv_freq = 1.0 / (base_theta ** (freqs / head_dim))
    t = jnp.arange(seq_len, dtype=jnp.float32)
    sinusoid = jnp.einsum('i,j->ij', t, inv_freq)          # (T, d/2)
    return jnp.cos(sinusoid), jnp.sin(sinusoid)


def _deinterleave_qk_rows(w_qkv, num_heads, head_dim):
    """Permute the q/k output features of the fused qkv weight from the
    interleaved (even, odd) RoPE layout to the NeoX half-split layout.

    Attention scores are invariant under a shared per-head permutation of the
    q and k feature dims (v is untouched), so the module output is preserved
    exactly while the in-kernel rotate-half becomes a cheap half-swap.
    """
    H = num_heads * head_dim
    perm_d = jnp.concatenate([jnp.arange(0, head_dim, 2),
                              jnp.arange(1, head_dim, 2)])
    per_head = (jnp.arange(num_heads)[:, None] * head_dim +
                perm_d[None, :]).reshape(-1)               # (H,)
    row_perm = jnp.concatenate([per_head, H + per_head, 2 * H + jnp.arange(H)])
    return w_qkv[row_perm]


# ----------------------------------------------------------------------------
# Full forward pass (glue reshapes in plain JAX, compute in Pallas)
# ----------------------------------------------------------------------------
def multi_head_attention(x, w_qkv, w_out, num_heads, *, kv_tile=512):
    B, T, Hid = x.shape
    d = Hid // num_heads

    # one-time weight prep (would normally be hoisted out of the hot path)
    w_qkv_p = _deinterleave_qk_rows(w_qkv, num_heads, d)

    # fused qkv projection, weight consumed in native (out, in) layout
    qkv = pallas_linear(x.reshape(B * T, Hid), w_qkv_p)        # (B*T, 3H)

    # b t (qkv h d) -> qkv b h t d
    # TODO(synk): for head_dim >= 128 this split could be done with index_maps
    # directly on the projection output (no HBM transpose); with d < 128 the
    # per-head lane slice would violate the (8,128) block rule, so leave to XLA.
    qkv = qkv.reshape(B, T, 3, num_heads, d)
    qkv = jnp.transpose(qkv, (2, 0, 3, 1, 4))
    q, k, v = qkv[0], qkv[1], qkv[2]

    cos, sin = rope_tables(T, d)                               # (T, d/2)
    cos_cat = jnp.concatenate([cos, cos], axis=-1)             # (T, d)
    sin_signed = jnp.concatenate([-sin, sin], axis=-1)         # sign folded in

    o = rope_flash_attention(q, k, v, cos_cat, sin_signed,
                             kv_tile=kv_tile)                  # (B, h, T, d)
    o = jnp.transpose(o, (0, 2, 1, 3)).reshape(B, T, Hid)      # b h t d -> b t (h d)

    out = pallas_linear(o.reshape(B * T, Hid), w_out)          # out_proj
    return out.reshape(B, T, Hid)


# ----------------------------------------------------------------------------
# Pure-JAX reference (mirrors the PyTorch forward exactly) for correctness.
# ----------------------------------------------------------------------------
def reference_forward(x, w_qkv, w_out, num_heads):
    B, T, H = x.shape
    d = H // num_heads
    qkv = x @ w_qkv.T
    qkv = qkv.reshape(B, T, 3, num_heads, d).transpose(2, 0, 3, 1, 4)
    q, k, v = qkv[0], qkv[1], qkv[2]
    cos, sin = rope_tables(T, d)
    cos_rep = jnp.repeat(cos, 2, axis=-1)[None, None]
    sin_rep = jnp.repeat(sin, 2, axis=-1)[None, None]

    def rot(t):
        te, to = t[..., 0::2], t[..., 1::2]
        return jnp.stack((-to, te), axis=-1).reshape(t.shape)

    q = q * cos_rep + rot(q) * sin_rep
    k = k * cos_rep + rot(k) * sin_rep
    s = jnp.einsum('bhtd,bhsd->bhts', q, k) / math.sqrt(d)
    p = jax.nn.softmax(s, axis=-1)
    o = jnp.einsum('bhts,bhsd->bhtd', p, v)
    o = o.transpose(0, 2, 1, 3).reshape(B, T, H)
    return o @ w_out.T


if __name__ == "__main__":
    key = jax.random.PRNGKey(0)

    # config 1: the small module-consistent shapes
    B, T, hidden, num_heads = 2, 8, 32, 4
    kx, kq, ko, kx2, kq2, ko2 = jax.random.split(key, 6)
    x = jax.random.normal(kx, (B, T, hidden), dtype=jnp.float32)
    w_qkv = jax.random.normal(kq, (hidden * 3, hidden), dtype=jnp.float32) * 0.05
    w_out = jax.random.normal(ko, (hidden, hidden), dtype=jnp.float32) * 0.05

    out = multi_head_attention(x, w_qkv, w_out, num_heads)
    out = jax.block_until_ready(out)
    ref = reference_forward(x, w_qkv, w_out, num_heads)
    assert out.shape == (B, T, hidden)
    assert jnp.allclose(out, ref, atol=2e-2, rtol=2e-2), "mismatch vs reference (cfg1)"

    # config 2: forces multiple KV tiles to exercise the online-softmax path
    B2, T2, hidden2, heads2 = 2, 16, 64, 4
    x2 = jax.random.normal(kx2, (B2, T2, hidden2), dtype=jnp.float32)
    w_qkv2 = jax.random.normal(kq2, (hidden2 * 3, hidden2), dtype=jnp.float32) * 0.05
    w_out2 = jax.random.normal(ko2, (hidden2, hidden2), dtype=jnp.float32) * 0.05

    out2 = multi_head_attention(x2, w_qkv2, w_out2, heads2, kv_tile=8)
    out2 = jax.block_until_ready(out2)
    ref2 = reference_forward(x2, w_qkv2, w_out2, heads2)
    assert out2.shape == (B2, T2, hidden2)
    assert jnp.allclose(out2, ref2, atol=2e-2, rtol=2e-2), "mismatch vs reference (cfg2)"

    print("KERNEL_OK")
</pallas_src>

<mosaic_0001>
module attributes {stable_mosaic.version = 11 : i64} {
  func.func @_linear_kernel(%arg0: i32, %arg1: i32, %arg2: i32, %arg3: memref<16x32xf32, #tpu.memory_space<vmem>>, %arg4: memref<96x32xf32, #tpu.memory_space<vmem>>, %arg5: memref<16x96xf32, #tpu.memory_space<vmem>>, %arg6: memref<16x96xf32, #tpu.memory_space<vmem>>) attributes {dimension_semantics = [#tpu.dimension_semantics<parallel>, #tpu.dimension_semantics<parallel>, #tpu.dimension_semantics<arbitrary>], iteration_bounds = array<i64: 1, 1, 1>, scalar_prefetch = 0 : i64, scratch_operands = 1 : i64, tpu.core_type = #tpu.core_type<tc>, window_params = [{transform_indices = @transform_0, window_bounds = array<i64: 16, 32>}, {transform_indices = @transform_1, window_bounds = array<i64: 96, 32>}, {transform_indices = @transform_2, window_bounds = array<i64: 16, 96>}]} {
    %c0_i32 = arith.constant 0 : i32
    %0 = arith.cmpi eq, %arg2, %c0_i32 : i32
    %1 = arith.extui %0 : i1 to i32
    %c0_i32_0 = arith.constant 0 : i32
    %2 = arith.cmpi ne, %1, %c0_i32_0 : i32
    scf.if %2 {
      %cst_10 = arith.constant 0.000000e+00 : f32
      %12 = vector.broadcast %cst_10 : f32 to vector<16x96xf32>
      %c0_11 = arith.constant 0 : index
      %c0_12 = arith.constant 0 : index
      %13 = vector.load %arg6[%c0_11, %c0_12] : memref<16x96xf32, #tpu.memory_space<vmem>>, vector<16x96xf32>
      tpu.vector_store %arg6[%c0_11, %c0_12], %12 {strides = array<i32>} : memref<16x96xf32, #tpu.memory_space<vmem>>, vector<16x96xf32>,
    } else {
    }
    %c0 = arith.constant 0 : index
    %c0_1 = arith.constant 0 : index
    %3 = vector.load %arg6[%c0, %c0_1] : memref<16x96xf32, #tpu.memory_space<vmem>>, vector<16x96xf32>
    %c0_2 = arith.constant 0 : index
    %c0_3 = arith.constant 0 : index
    %4 = vector.load %arg3[%c0_2, %c0_3] : memref<16x32xf32, #tpu.memory_space<vmem>>, vector<16x32xf32>
    %c0_4 = arith.constant 0 : index
    %c0_5 = arith.constant 0 : index
    %5 = vector.load %arg4[%c0_4, %c0_5] : memref<96x32xf32, #tpu.memory_space<vmem>>, vector<96x32xf32>
    %cst = arith.constant dense<0.000000e+00> : vector<16x96xf32>
    %6 = tpu.matmul %4, %5, %cst {dimension_numbers = #tpu.dot_dimension_numbers<[1], [1], [0], [0], [0, 0, 1, 0], [], []>} : vector<16x32xf32>, vector<96x32xf32>, vector<16x96xf32> -> vector<16x96xf32>
    %7 = arith.addf %3, %6 : vector<16x96xf32>
    %c0_6 = arith.constant 0 : index
    %c0_7 = arith.constant 0 : index
    %8 = vector.load %arg6[%c0_6, %c0_7] : memref<16x96xf32, #tpu.memory_space<vmem>>, vector<16x96xf32>
    tpu.vector_store %arg6[%c0_6, %c0_7], %7 {strides = array<i32>} : memref<16x96xf32, #tpu.memory_space<vmem>>, vector<16x96xf32>,
    %c0_i32_8 = arith.constant 0 : i32
    %9 = arith.cmpi eq, %arg2, %c0_i32_8 : i32
    %10 = arith.extui %9 : i1 to i32
    %c0_i32_9 = arith.constant 0 : i32
    %11 = arith.cmpi ne, %10, %c0_i32_9 : i32
    scf.if %11 {
      %c0_10 = arith.constant 0 : index
      %c0_11 = arith.constant 0 : index
      %12 = vector.load %arg6[%c0_10, %c0_11] : memref<16x96xf32, #tpu.memory_space<vmem>>, vector<16x96xf32>
      %c0_12 = arith.constant 0 : index
      %c0_13 = arith.constant 0 : index
      %13 = vector.load %arg5[%c0_12, %c0_13] : memref<16x96xf32, #tpu.memory_space<vmem>>, vector<16x96xf32>
      tpu.vector_store %arg5[%c0_12, %c0_13], %12 {strides = array<i32>} : memref<16x96xf32, #tpu.memory_space<vmem>>, vector<16x96xf32>,
    } else {
    }
    return
  }
  func.func @transform_0(%arg0: i32, %arg1: i32, %arg2: i32) -> (i32, i32) {
    %c0_i32 = arith.constant 0 : i32
    return %arg0, %arg2 : i32, i32
  }
  func.func @transform_1(%arg0: i32, %arg1: i32, %arg2: i32) -> (i32, i32) {
    %c0_i32 = arith.constant 0 : i32
    return %arg1, %arg2 : i32, i32
  }
  func.func @transform_2(%arg0: i32, %arg1: i32, %arg2: i32) -> (i32, i32) {
    %c0_i32 = arith.constant 0 : i32
    return %arg0, %arg1 : i32, i32
  }
}

</mosaic_0001>

<llo_original>
// kernel: tpu_custom_call.1
$region0: #{tpu_custom_call.1}
  #allocation0 [shape = 'u32[]', space=smem, size = 0x4, offset = 0x4, fixed_abs, tag = 'smem constant byte address 0x4 - core index']
  #allocation1 [shape = 'u32[144,128]{1,0:T(1,128)}', space=vmem, size = 0x12000, scoped, tag = 'internal scratch']
  #allocation2 [shape = 'f32[16,96]{1,0:T(8,128)}', space=vmem, size = 0x2000, scoped, tag = 'scratch operand']
  %s0 = inlined_call_operand.vmem [shape: f32[16,32], index: 0, kind: input, shape index: {}]
  %s1 = inlined_call_operand.vmem [shape: f32[96,32], index: 1, kind: input, shape index: {}]
  %s2 = inlined_call_operand.hbm [shape: f32[16,96], index: 2, kind: output, shape index: {}]
  %s3 = sld [smem:[#allocation0]]
  $region26: #{tpu_custom_call.1} parent=0
    _
  %s5 = ssub.s32 1, %s3
  %s6 = scalar_select 0, %s5, %s3
  $region1: #{tpu_custom_call.1} parent=0
    #allocation3 [shape = 'u8[8192]{0}', space=vmem, size = 0x2000, scoped, tag = 'output window, operand 0, single buffered']
    #allocation4 [shape = 's32[1]{0}', space=sflag, size = 0x4, scoped, tag = 'scoped memory for tpu_custom_call.1']
    %7 = vsyncpa [#allocation4], 0
    // Predicated region
    $region2: #{tpu_custom_call.1} parent=1 // pred_check
      _
    $region3: #{tpu_custom_call.1} parent=1 // pred_check_branch
      %9 = sbr.rel (0) target = $region5
    $region4: #{tpu_custom_call.1} parent=1 // pred_region
      _
    $region5: #{tpu_custom_call.1} parent=1 // pred_fallthru
      _
    // Predicated region
    $region6: #{tpu_custom_call.1} parent=1 // pred_check
      _
    $region7: #{tpu_custom_call.1} parent=1 // pred_check_branch
      %11 = sbr.rel (0) target = $region9
    $region8: #{tpu_custom_call.1} parent=1 // pred_region
      _
    $region9: #{tpu_custom_call.1} parent=1 // pred_fallthru
      _
    %p12 = scmp.eq.s32.totalorder 0, 0
    // Predicated region
    $region10: #{tpu_custom_call.1} parent=1 // pred_check
      %p13 = pneg %p12
    $region11: #{tpu_custom_call.1} parent=1 // pred_check_branch
      %15 = sbr.rel (%p13) target = $region13
    $region12: #{tpu_custom_call.1} parent=1 // pred_region
      %vm16 = vcmask 785408
      %17 = vst.msk [vmem:[#allocation2] sm:$0xff] %vm16, 0.0
      %18 = vst.msk [vmem:[#allocation2 + $0x8] sm:$0xff] %vm16, 0.0
    $region13: #{tpu_custom_call.1} parent=1 // pred_fallthru
      _
    %v19 = vld [vmem:[#allocation2] sm:$0xff]
    %v20 = vld [vmem:[#allocation2 + $0x8] sm:$0xff]
    %v21 = vld [vmem:[%s0] sm:$0xff]
    %v22 = vld [vmem:[%s0 + $0x8] sm:$0xff]
    %v23 = vld [vmem:[%s1] sm:$0xff]
    %v24 = vld [vmem:[%s1 + $0x8] sm:$0xff]
    %v25 = vld [vmem:[%s1 + $0x10] sm:$0xff]
    %v26 = vld [vmem:[%s1 + $0x18] sm:$0xff]
    %v27 = vld [vmem:[%s1 + $0x20] sm:$0xff]
    %v28 = vld [vmem:[%s1 + $0x28] sm:$0xff]
    %v29 = vld [vmem:[%s1 + $0x30] sm:$0xff]
    %v30 = vld [vmem:[%s1 + $0x38] sm:$0xff]
    %v31 = vld [vmem:[%s1 + $0x40] sm:$0xff]
    %v32 = vld [vmem:[%s1 + $0x48] sm:$0xff]
    %v33 = vld [vmem:[%s1 + $0x50] sm:$0xff]
    %v34 = vld [vmem:[%s1 + $0x58] sm:$0xff]
    %vm35 = vcmask 261120
    %v37 = vsel %vm35, %v21, 0
    %v40 = vsel %vm35, %v22, 0
    %v43 = vsel %vm35, %v23, 0
    %v46 = vsel %vm35, %v24, 0
    %v49 = vsel %vm35, %v25, 0
    %v52 = vsel %vm35, %v26, 0
    %v55 = vsel %vm35, %v27, 0
    %v58 = vsel %vm35, %v28, 0
    %v61 = vsel %vm35, %v29, 0
    %v64 = vsel %vm35, %v30, 0
    %v67 = vsel %vm35, %v31, 0
    %v70 = vsel %vm35, %v32, 0
    %v73 = vsel %vm35, %v33, 0
    %v76 = vsel %vm35, %v34, 0
    %78 = vmatprep.subr.mxu0 0.0
    %79 = vmatpush1.xpose.msra.mxu0 %v43
    %80 = vmatprep.subr.mxu0 0.0
    %81 = vmatpush1.xpose.msra.mxu0 %v46
    %82 = vmatprep.subr.mxu0 0.0
    %83 = vmatpush1.xpose.msra.mxu0 %v49
    %84 = vmatprep.subr.mxu0 0.0
    %85 = vmatpush1.xpose.msra.mxu0 %v52
    %86 = vmatprep.subr.mxu0 0.0
    %87 = vmatpush1.xpose.msra.mxu0 %v55
    %88 = vmatprep.subr.mxu0 0.0
    %89 = vmatpush1.xpose.msra.mxu0 %v58
    %90 = vmatprep.subr.mxu0 0.0
    %91 = vmatpush1.xpose.msra.mxu0 %v61
    %92 = vmatprep.subr.mxu0 0.0
    %93 = vmatpush1.xpose.msra.mxu0 %v64
    %94 = vmatprep.subr.mxu0 0.0
    %95 = vmatpush1.xpose.msra.mxu0 %v67
    %96 = vmatprep.subr.mxu0 0.0
    %97 = vmatpush1.xpose.msra.mxu0 %v70
    %98 = vmatprep.subr.mxu0 0.0
    %99 = vmatpush1.xpose.msra.mxu0 %v73
    %100 = vmatprep.subr.mxu0 0.0
    %101 = vmatpush1.xpose.msra.mxu0 %v76
    %102 = vmatprep.subr.mxu0 0.0
    %103 = vmatpush1.xpose.msra.mxu0 0.0
    %104 = vmatprep.subr.mxu0 0.0
    %105 = vmatpush1.xpose.msra.mxu0 0.0
    %106 = vmatprep.subr.mxu0 0.0
    %107 = vmatpush1.xpose.msra.mxu0 0.0
    %108 = vmatprep.subr.mxu0 0.0
    %109 = vmatpush1.xpose.msra.mxu0 0.0
    %110 = vmatprep.subr.mxu0 0.0
    %111 = vmatpush1.xpose.msra.mxu0 0.0
    %112 = vmatprep.subr.mxu0 0.0
    %113 = vmatpush1.xpose.msra.mxu0 0.0
    %114 = vmatprep.subr.mxu0 0.0
    %115 = vmatpush1.xpose.msra.mxu0 0.0
    %116 = vmatprep.subr.mxu0 0.0
    %117 = vmatpush1.xpose.msra.mxu0 0.0
    %118 = vmatprep.subr.mxu0 0.0
    %119 = vmatpush1.xpose.msra.mxu0 0.0
    %120 = vmatprep.subr.mxu0 0.0
    %121 = vmatpush1.xpose.msra.mxu0 0.0
    %122 = vmatprep.subr.mxu0 0.0
    %123 = vmatpush1.xpose.msra.mxu0 0.0
    %124 = vmatprep.subr.mxu0 0.0
    %125 = vmatpush1.xpose.msra.mxu0 0.0
    %126 = vmatprep.subr.mxu0 0.0
    %127 = vmatpush1.xpose.msra.mxu0 0.0
    %128 = vmatprep.subr.mxu0 0.0
    %129 = vmatpush1.xpose.msra.mxu0 0.0
    %130 = vmatprep.subr.mxu0 0.0
    %131 = vmatpush1.xpose.msra.mxu0 0.0
    %132 = vmatprep.subr.mxu0 0.0
    %133 = vmatpush1.xpose.msra.mxu0 0.0
    %134 = vmatprep.subr.mxu0 0.0
    %135 = vmatpush1.xpose.msra.mxu0 0.0
    %136 = vmatprep.subr.mxu0 0.0
    %137 = vmatpush1.xpose.msra.mxu0 0.0
    %138 = vmatprep.subr.mxu0 0.0
    %139 = vmatpush1.xpose.msra.mxu0 0.0
    %140 = vmatprep.subr.mxu0 0.0
    %141 = vmatpush1.xpose.msra.mxu0 0.0
    %142 = vmatprep.mubr.f32.mxu0 0.0
    %143 = vmatmul.mubr.f32.gmra.mrb[0].mxu0 %v37
    %v144 = vpop.f32.mrb[0].mxu0
    %v145 = vadd.f32 0.0, %v144
    %v146 = vpop.f32.mrb[0].mxu0
    %147 = vmatprep.mubr.f32.mxu0 0.0
    %148 = vmatmul.mubr.f32.gmra.mrb[0].mxu0 %v40
    %v149 = vpop.f32.mrb[0].mxu0
    %v150 = vadd.f32 0.0, %v149
    %v151 = vpop.f32.mrb[0].mxu0
    %152 = vdwg.mxu0
    %v153 = vadd.f32 %v19, %v145
    %v154 = vadd.f32 %v20, %v150
    %vm155 = vcmask 785408
    %156 = vst.msk [vmem:[#allocation2] sm:$0xff] %vm155, %v153
    %157 = vst.msk [vmem:[#allocation2 + $0x8] sm:$0xff] %vm155, %v154
    // Predicated region
    $region14: #{tpu_custom_call.1} parent=1 // pred_check
      %p158 = pneg %p12
    $region15: #{tpu_custom_call.1} parent=1 // pred_check_branch
      %160 = sbr.rel (%p158) target = $region17
    $region16: #{tpu_custom_call.1} parent=1 // pred_region
      %v161 = vld [vmem:[#allocation2] sm:$0xff]
      %v162 = vld [vmem:[#allocation2 + $0x8] sm:$0xff]
      %163 = vst.msk [vmem:[#allocation3] sm:$0xff] %vm155, %v161
      %164 = vst.msk [vmem:[#allocation3 + $0x8] sm:$0xff] %vm155, %v162
    $region17: #{tpu_custom_call.1} parent=1 // pred_fallthru
      _
    // Predicated region
    $region18: #{tpu_custom_call.1} parent=1 // pred_check
      _
    $region19: #{tpu_custom_call.1} parent=1 // pred_check_branch
      %166 = sbr.rel (0) target = $region21
    $region20: #{tpu_custom_call.1} parent=1 // pred_region
      %s168 = ssub.s32 256, 256
      %169 = vsyncadd [#allocation4], %s168
      %s170 = sshll.u32 [#allocation3], 4
      %s171 = int_to_ptr.vmem [resolvable:$true] %s170
      %176 = dma.vmem_to_hbm [thread:$0]  %s171, 256, %s2, [#allocation4], 128, 128, 8
    $region21: #{tpu_custom_call.1} parent=1 // pred_fallthru
      _
    // Predicated region
    $region22: #{tpu_custom_call.1} parent=1 // pred_check
      _
    $region23: #{tpu_custom_call.1} parent=1 // pred_check_branch
      %178 = sbr.rel (0) target = $region25
    $region24: #{tpu_custom_call.1} parent=1 // pred_region
      %179 = dma.done [#allocation4], 256
    $region25: #{tpu_custom_call.1} parent=1 // pred_fallthru
      _
    %180 = vsyncpa [#allocation4], 1

</llo_original>
